<compile_context>
chip_gen: v6e
topology: v6e:2x2x1
jax: 0.10.0
libtpu: 0.0.40
codegen_flags: <defaults>
</compile_context>

<pallas_src>
import functools
import math

import jax
import jax.numpy as jnp
from jax import lax
from jax.experimental import pallas as pl
from jax.experimental.pallas import tpu as pltpu

LOG_2PI = math.log(2.0 * math.pi)
HIDDEN = 256


def _lane_select(vec, lane_iota, idx):
    """Extract the element at lane `idx` of a (1, N) f32 vector as a (1, 1) value."""
    return jnp.sum(jnp.where(lane_iota == idx, vec, 0.0), axis=1, keepdims=True)


def _fused_forward_kernel(state_ref, eps_ref, scale_ref, center_ref,
                          w1_ref, b1_ref, w2_ref, b2_ref, w3_ref, b3_ref,
                          new_state_ref, samp_lp_ref, *, dim):
    d = dim
    C = d + d * d

    # ---------------- PolicyNet MLP: Linear->ReLU->Linear->ReLU->Linear->Tanh, /100 --------
    state = state_ref[...]                                            # (1, C) = [mean, vec(P)]
    h = jnp.dot(state, w1_ref[...], preferred_element_type=jnp.float32) + b1_ref[...]
    h = jnp.maximum(h, 0.0)
    h = jnp.dot(h, w2_ref[...], preferred_element_type=jnp.float32) + b2_ref[...]
    h = jnp.maximum(h, 0.0)
    upd = jnp.tanh(jnp.dot(h, w3_ref[...], preferred_element_type=jnp.float32)
                   + b3_ref[...]) / 100.0                             # (1, C)

    # ---------------- State update: mean lanes clipped to [-1, 1], precision lanes raw -----
    lane_c = lax.broadcasted_iota(jnp.int32, (1, C), 1)
    new_state = state + upd
    new_state = jnp.where(lane_c < d, jnp.clip(new_state, -1.0, 1.0), new_state)
    new_state_ref[...] = new_state                                    # single full-row store

    # ---------------- MVN(loc=new_mean, precision=new_P): sample + log_prob ----------------
    # torch's _precision_to_scale_tril:
    #   Lf    = cholesky(flip(P))          (lower; only the lower triangle of flip(P) is read)
    #   L_inv = flip(Lf)^T                 (lower)
    #   L     = L_inv^{-1}                 (scale_tril, L @ L^T = P^{-1})
    # sample_raw   = mean + L @ eps  == mean + solve(L_inv, eps)   (forward substitution)
    # half_log_det = sum(log diag L) == -sum(log diag Lf)
    # Everything is unrolled at trace time; each matrix element is a (1,1) vreg value
    # extracted from the lane-packed state row (VPU select + lane reduce, no MXU/LAPACK).
    def p_elem(i, j):                       # element (i, j) of the new precision matrix
        return _lane_select(new_state, lane_c, d + i * d + j)

    Lf = [[None] * d for _ in range(d)]
    for j in range(d):
        s = p_elem(d - 1 - j, d - 1 - j)                              # flip(P)[j, j]
        for k in range(j):
            s = s - Lf[j][k] * Lf[j][k]
        Lf[j][j] = jnp.sqrt(s)
        inv_diag = 1.0 / Lf[j][j]
        for i in range(j + 1, d):
            t = p_elem(d - 1 - i, d - 1 - j)                          # flip(P)[i, j]
            for k in range(j):
                t = t - Lf[i][k] * Lf[j][k]
            Lf[i][j] = t * inv_diag

    # Forward substitution y = solve(L_inv, eps), with L_inv[i, j] = Lf[d-1-j, d-1-i].
    eps = eps_ref[...]                                                # (1, d)
    lane_d = lax.broadcasted_iota(jnp.int32, (1, d), 1)
    y = [None] * d
    for i in range(d):
        t = _lane_select(eps, lane_d, i)
        for j in range(i):
            t = t - Lf[d - 1 - j][d - 1 - i] * y[j]
        y[i] = t / Lf[d - 1 - i][d - 1 - i]

    # Scatter y back into a (1, d) vector and finish the sample with vector ops.
    y_vec = jnp.zeros((1, d), jnp.float32)
    for i in range(d):
        y_vec = jnp.where(lane_d == i, y[i], y_vec)
    sample_raw = new_state[:, :d] + y_vec                             # loc + L @ eps
    samp_lp_ref[:, 0:d] = sample_raw * scale_ref[...] + center_ref[...]

    # log_prob of the raw sample (as in the reference; taken before rescaling).
    # Mahalanobis term: ||L^{-1}(sample_raw - mean)||^2 == ||eps||^2 exactly.
    maha = jnp.sum(eps * eps, axis=1, keepdims=True)                  # (1, 1)
    half_log_det = jnp.zeros((1, 1), jnp.float32)
    for k in range(d):
        half_log_det = half_log_det - jnp.log(Lf[k][k])               # sum(log diag L)
    logprob = -0.5 * (d * LOG_2PI + maha) - half_log_det              # (1, 1)
    samp_lp_ref[:, d:d + 1] = logprob


def fused_forward(state_row, eps_row, scale_row, center_row, params):
    """state_row (1, C) -> (new_state (1, C), [sample|logprob] (1, d+1))."""
    dim = scale_row.shape[1]
    C = dim + dim * dim
    vmem = pl.BlockSpec(memory_space=pltpu.MemorySpace.VMEM)

    n_w = C * HIDDEN + HIDDEN * HIDDEN + HIDDEN * C
    cost = pl.CostEstimate(
        flops=2 * n_w + 6 * dim * dim,
        transcendentals=C + 3 * dim,                                  # tanh + sqrt + log
        bytes_accessed=4 * (n_w + 2 * HIDDEN + C + 3 * dim + 2 * C + dim + 1))

    kernel = functools.partial(_fused_forward_kernel, dim=dim)
    return pl.pallas_call(
        kernel,
        out_shape=(jax.ShapeDtypeStruct((1, C), jnp.float32),
                   jax.ShapeDtypeStruct((1, dim + 1), jnp.float32)),
        in_specs=[vmem] * 10,
        out_specs=(vmem, vmem),
        input_output_aliases={0: 0},            # state row is updated in place
        cost_estimate=cost,
    )(state_row, eps_row, scale_row, center_row,
      params["w1"], params["b1"], params["w2"], params["b2"],
      params["w3"], params["b3"])


def init_policy_params(key, dim):
    """nn.Linear-style deterministic init (uniform +-1/sqrt(fan_in)); float32 for parity."""
    C, H = dim * dim + dim, HIDDEN

    def linear(k, fan_in, fan_out):
        kw, kb = jax.random.split(k)
        bound = 1.0 / math.sqrt(fan_in)
        w = jax.random.uniform(kw, (fan_in, fan_out), jnp.float32, -bound, bound)
        b = jax.random.uniform(kb, (1, fan_out), jnp.float32, -bound, bound)
        return w, b

    k1, k2, k3 = jax.random.split(key, 3)
    w1, b1 = linear(k1, C, H)
    w2, b2 = linear(k2, H, H)
    w3, b3 = linear(k3, H, C)
    return {"w1": w1, "b1": b1, "w2": w2, "b2": b2, "w3": w3, "b3": b3}


def learnable_gaussian_forward(params, mean, precision_component,
                               vals_scale, vals_center, sample_key):
    """Forward pass of learnable_highd_gaussian_continuous (dirichlet=False)."""
    dim = mean.shape[0]
    # Lane-packed state row [mean, vec(P)] -- matches torch.cat([mean, P.view(-1)]).
    state_row = jnp.concatenate([mean, precision_component.reshape(-1)])[None, :]
    eps = jax.random.normal(sample_key, (1, dim), dtype=jnp.float32)

    new_state, samp_lp = fused_forward(
        state_row, eps, vals_scale[None, :], vals_center[None, :], params)

    sample = samp_lp[0, :dim]
    logprob = samp_lp[0, dim]
    new_mean = new_state[0, :dim]
    new_precision = new_state[0, dim:].reshape(dim, dim)
    return sample, logprob, new_mean, new_precision


if __name__ == "__main__":
    key = jax.random.PRNGKey(0)
    k_params, k_sample = jax.random.split(key)

    # Module config: vals is a list of per-dimension value grids; dim = len(vals).
    dim = 4
    vals = [jnp.linspace(float(i), float(i) + 2.0, 5) for i in range(dim)]
    vals_center = jnp.array([(v[0] + v[-1]) / 2.0 for v in vals], dtype=jnp.float32)
    vals_scale = jnp.array([v[-1] - v[0] for v in vals], dtype=jnp.float32)

    # Buffers from __init__:
    mean = jnp.zeros((dim,), jnp.float32) + 1e-7
    precision_val = 5.0
    precision_component = jnp.sqrt(jnp.eye(dim, dtype=jnp.float32) * precision_val) + 1e-7

    params = init_policy_params(k_params, dim)

    fwd = jax.jit(learnable_gaussian_forward)
    sample, logprob, new_mean, new_precision = fwd(
        params, mean, precision_component, vals_scale, vals_center, k_sample)

    jax.block_until_ready((sample, logprob, new_mean, new_precision))
    assert sample.shape == (dim,) and logprob.shape == ()
    assert new_mean.shape == (dim,) and new_precision.shape == (dim, dim)
    assert bool(jnp.all(jnp.isfinite(sample))) and bool(jnp.isfinite(logprob))
    print("KERNEL_OK")
</pallas_src>

<mosaic_0001>
module attributes {stable_mosaic.version = 11 : i64} {
  func.func @_fused_forward_kernel(%arg0: memref<1x20xf32, #tpu.memory_space<vmem>>, %arg1: memref<1x4xf32, #tpu.memory_space<vmem>>, %arg2: memref<1x4xf32, #tpu.memory_space<vmem>>, %arg3: memref<1x4xf32, #tpu.memory_space<vmem>>, %arg4: memref<20x256xf32, #tpu.memory_space<vmem>>, %arg5: memref<1x256xf32, #tpu.memory_space<vmem>>, %arg6: memref<256x256xf32, #tpu.memory_space<vmem>>, %arg7: memref<1x256xf32, #tpu.memory_space<vmem>>, %arg8: memref<256x20xf32, #tpu.memory_space<vmem>>, %arg9: memref<1x20xf32, #tpu.memory_space<vmem>>, %arg10: memref<1x20xf32, #tpu.memory_space<vmem>>, %arg11: memref<1x5xf32, #tpu.memory_space<vmem>>) attributes {dimension_semantics = [], scalar_prefetch = 0 : i64, scratch_operands = 0 : i64, tpu.core_type = #tpu.core_type<tc>} {
    %c0 = arith.constant 0 : index
    %c0_0 = arith.constant 0 : index
    %0 = vector.load %arg0[%c0, %c0_0] : memref<1x20xf32, #tpu.memory_space<vmem>>, vector<1x20xf32>
    %c0_1 = arith.constant 0 : index
    %c0_2 = arith.constant 0 : index
    %1 = vector.load %arg4[%c0_1, %c0_2] : memref<20x256xf32, #tpu.memory_space<vmem>>, vector<20x256xf32>
    %cst = arith.constant dense<0.000000e+00> : vector<1x256xf32>
    %2 = tpu.matmul %0, %1, %cst {dimension_numbers = #tpu.dot_dimension_numbers<[1], [0], [0], [1], [0, 0, 1, 1], [], []>} : vector<1x20xf32>, vector<20x256xf32>, vector<1x256xf32> -> vector<1x256xf32>
    %c0_3 = arith.constant 0 : index
    %c0_4 = arith.constant 0 : index
    %3 = vector.load %arg5[%c0_3, %c0_4] : memref<1x256xf32, #tpu.memory_space<vmem>>, vector<1x256xf32>
    %4 = arith.addf %2, %3 : vector<1x256xf32>
    %cst_5 = arith.constant 0.000000e+00 : f32
    %5 = vector.broadcast %cst_5 : f32 to vector<1x256xf32>
    %6 = arith.maximumf %4, %5 : vector<1x256xf32>
    %c0_6 = arith.constant 0 : index
    %c0_7 = arith.constant 0 : index
    %7 = vector.load %arg6[%c0_6, %c0_7] : memref<256x256xf32, #tpu.memory_space<vmem>>, vector<256x256xf32>
    %cst_8 = arith.constant dense<0.000000e+00> : vector<1x256xf32>
    %8 = tpu.matmul %6, %7, %cst_8 {dimension_numbers = #tpu.dot_dimension_numbers<[1], [0], [0], [1], [0, 0, 1, 1], [], []>} : vector<1x256xf32>, vector<256x256xf32>, vector<1x256xf32> -> vector<1x256xf32>
    %c0_9 = arith.constant 0 : index
    %c0_10 = arith.constant 0 : index
    %9 = vector.load %arg7[%c0_9, %c0_10] : memref<1x256xf32, #tpu.memory_space<vmem>>, vector<1x256xf32>
    %10 = arith.addf %8, %9 : vector<1x256xf32>
    %cst_11 = arith.constant 0.000000e+00 : f32
    %11 = vector.broadcast %cst_11 : f32 to vector<1x256xf32>
    %12 = arith.maximumf %10, %11 : vector<1x256xf32>
    %c0_12 = arith.constant 0 : index
    %c0_13 = arith.constant 0 : index
    %13 = vector.load %arg8[%c0_12, %c0_13] : memref<256x20xf32, #tpu.memory_space<vmem>>, vector<256x20xf32>
    %cst_14 = arith.constant dense<0.000000e+00> : vector<1x20xf32>
    %14 = tpu.matmul %12, %13, %cst_14 {dimension_numbers = #tpu.dot_dimension_numbers<[1], [0], [0], [1], [0, 0, 1, 1], [], []>} : vector<1x256xf32>, vector<256x20xf32>, vector<1x20xf32> -> vector<1x20xf32>
    %c0_15 = arith.constant 0 : index
    %c0_16 = arith.constant 0 : index
    %15 = vector.load %arg9[%c0_15, %c0_16] : memref<1x20xf32, #tpu.memory_space<vmem>>, vector<1x20xf32>
    %16 = arith.addf %14, %15 : vector<1x20xf32>
    %17 = math.tanh %16 : vector<1x20xf32>
    %cst_17 = arith.constant 1.000000e+02 : f32
    %18 = vector.broadcast %cst_17 : f32 to vector<1x20xf32>
    %19 = arith.divf %17, %18 : vector<1x20xf32>
    %20 = tpu.iota {dimensions = array<i32: 1>} : vector<1x20xi32>
    %21 = arith.addf %0, %19 : vector<1x20xf32>
    %c4_i32 = arith.constant 4 : i32
    %22 = vector.broadcast %c4_i32 : i32 to vector<1x20xi32>
    %23 = arith.cmpi slt, %20, %22 : vector<1x20xi32>
    %cst_18 = arith.constant -1.000000e+00 : f32
    %cst_19 = arith.constant 1.000000e+00 : f32
    %24 = vector.broadcast %cst_18 : f32 to vector<1x20xf32>
    %25 = arith.maximumf %24, %21 : vector<1x20xf32>
    %26 = vector.broadcast %cst_19 : f32 to vector<1x20xf32>
    %27 = arith.minimumf %26, %25 : vector<1x20xf32>
    %28 = arith.select %23, %27, %21 : vector<1x20xi1>, vector<1x20xf32>
    %c0_20 = arith.constant 0 : index
    %c0_21 = arith.constant 0 : index
    %29 = vector.load %arg10[%c0_20, %c0_21] : memref<1x20xf32, #tpu.memory_space<vmem>>, vector<1x20xf32>
    tpu.vector_store %arg10[%c0_20, %c0_21], %28 {strides = array<i32>} : memref<1x20xf32, #tpu.memory_space<vmem>>, vector<1x20xf32>,
    %c19_i32 = arith.constant 19 : i32
    %30 = vector.broadcast %c19_i32 : i32 to vector<1x20xi32>
    %31 = arith.cmpi eq, %20, %30 : vector<1x20xi32>
    %cst_22 = arith.constant 0.000000e+00 : f32
    %32 = vector.broadcast %cst_22 : f32 to vector<1x20xf32>
    %33 = arith.select %31, %28, %32 : vector<1x20xi1>, vector<1x20xf32>
    %cst_23 = arith.constant dense<0.000000e+00> : vector<1xf32>
    %34 = vector.multi_reduction <add>, %33, %cst_23 [1] : vector<1x20xf32> to vector<1xf32>
    %35 = vector.shape_cast %34 : vector<1xf32> to vector<1x1xf32>
    %36 = math.sqrt %35 : vector<1x1xf32>
    %cst_24 = arith.constant 1.000000e+00 : f32
    %37 = vector.broadcast %cst_24 : f32 to vector<1x1xf32>
    %38 = arith.divf %37, %36 : vector<1x1xf32>
    %c15_i32 = arith.constant 15 : i32
    %39 = vector.broadcast %c15_i32 : i32 to vector<1x20xi32>
    %40 = arith.cmpi eq, %20, %39 : vector<1x20xi32>
    %cst_25 = arith.constant 0.000000e+00 : f32
    %41 = vector.broadcast %cst_25 : f32 to vector<1x20xf32>
    %42 = arith.select %40, %28, %41 : vector<1x20xi1>, vector<1x20xf32>
    %cst_26 = arith.constant dense<0.000000e+00> : vector<1xf32>
    %43 = vector.multi_reduction <add>, %42, %cst_26 [1] : vector<1x20xf32> to vector<1xf32>
    %44 = vector.shape_cast %43 : vector<1xf32> to vector<1x1xf32>
    %45 = arith.mulf %44, %38 : vector<1x1xf32>
    %c11_i32 = arith.constant 11 : i32
    %46 = vector.broadcast %c11_i32 : i32 to vector<1x20xi32>
    %47 = arith.cmpi eq, %20, %46 : vector<1x20xi32>
    %cst_27 = arith.constant 0.000000e+00 : f32
    %48 = vector.broadcast %cst_27 : f32 to vector<1x20xf32>
    %49 = arith.select %47, %28, %48 : vector<1x20xi1>, vector<1x20xf32>
    %cst_28 = arith.constant dense<0.000000e+00> : vector<1xf32>
    %50 = vector.multi_reduction <add>, %49, %cst_28 [1] : vector<1x20xf32> to vector<1xf32>
    %51 = vector.shape_cast %50 : vector<1xf32> to vector<1x1xf32>
    %52 = arith.mulf %51, %38 : vector<1x1xf32>
    %c7_i32 = arith.constant 7 : i32
    %53 = vector.broadcast %c7_i32 : i32 to vector<1x20xi32>
    %54 = arith.cmpi eq, %20, %53 : vector<1x20xi32>
    %cst_29 = arith.constant 0.000000e+00 : f32
    %55 = vector.broadcast %cst_29 : f32 to vector<1x20xf32>
    %56 = arith.select %54, %28, %55 : vector<1x20xi1>, vector<1x20xf32>
    %cst_30 = arith.constant dense<0.000000e+00> : vector<1xf32>
    %57 = vector.multi_reduction <add>, %56, %cst_30 [1] : vector<1x20xf32> to vector<1xf32>
    %58 = vector.shape_cast %57 : vector<1xf32> to vector<1x1xf32>
    %59 = arith.mulf %58, %38 : vector<1x1xf32>
    %c14_i32 = arith.constant 14 : i32
    %60 = vector.broadcast %c14_i32 : i32 to vector<1x20xi32>
    %61 = arith.cmpi eq, %20, %60 : vector<1x20xi32>
    %cst_31 = arith.constant 0.000000e+00 : f32
    %62 = vector.broadcast %cst_31 : f32 to vector<1x20xf32>
    %63 = arith.select %61, %28, %62 : vector<1x20xi1>, vector<1x20xf32>
    %cst_32 = arith.constant dense<0.000000e+00> : vector<1xf32>
    %64 = vector.multi_reduction <add>, %63, %cst_32 [1] : vector<1x20xf32> to vector<1xf32>
    %65 = vector.shape_cast %64 : vector<1xf32> to vector<1x1xf32>
    %66 = arith.mulf %45, %45 : vector<1x1xf32>
    %67 = arith.subf %65, %66 : vector<1x1xf32>
    %68 = math.sqrt %67 : vector<1x1xf32>
    %cst_33 = arith.constant 1.000000e+00 : f32
    %69 = vector.broadcast %cst_33 : f32 to vector<1x1xf32>
    %70 = arith.divf %69, %68 : vector<1x1xf32>
    %c10_i32 = arith.constant 10 : i32
    %71 = vector.broadcast %c10_i32 : i32 to vector<1x20xi32>
    %72 = arith.cmpi eq, %20, %71 : vector<1x20xi32>
    %cst_34 = arith.constant 0.000000e+00 : f32
    %73 = vector.broadcast %cst_34 : f32 to vector<1x20xf32>
    %74 = arith.select %72, %28, %73 : vector<1x20xi1>, vector<1x20xf32>
    %cst_35 = arith.constant dense<0.000000e+00> : vector<1xf32>
    %75 = vector.multi_reduction <add>, %74, %cst_35 [1] : vector<1x20xf32> to vector<1xf32>
    %76 = vector.shape_cast %75 : vector<1xf32> to vector<1x1xf32>
    %77 = arith.mulf %52, %45 : vector<1x1xf32>
    %78 = arith.subf %76, %77 : vector<1x1xf32>
    %79 = arith.mulf %78, %70 : vector<1x1xf32>
    %c6_i32 = arith.constant 6 : i32
    %80 = vector.broadcast %c6_i32 : i32 to vector<1x20xi32>
    %81 = arith.cmpi eq, %20, %80 : vector<1x20xi32>
    %cst_36 = arith.constant 0.000000e+00 : f32
    %82 = vector.broadcast %cst_36 : f32 to vector<1x20xf32>
    %83 = arith.select %81, %28, %82 : vector<1x20xi1>, vector<1x20xf32>
    %cst_37 = arith.constant dense<0.000000e+00> : vector<1xf32>
    %84 = vector.multi_reduction <add>, %83, %cst_37 [1] : vector<1x20xf32> to vector<1xf32>
    %85 = vector.shape_cast %84 : vector<1xf32> to vector<1x1xf32>
    %86 = arith.mulf %59, %45 : vector<1x1xf32>
    %87 = arith.subf %85, %86 : vector<1x1xf32>
    %88 = arith.mulf %87, %70 : vector<1x1xf32>
    %c9_i32 = arith.constant 9 : i32
    %89 = vector.broadcast %c9_i32 : i32 to vector<1x20xi32>
    %90 = arith.cmpi eq, %20, %89 : vector<1x20xi32>
    %cst_38 = arith.constant 0.000000e+00 : f32
    %91 = vector.broadcast %cst_38 : f32 to vector<1x20xf32>
    %92 = arith.select %90, %28, %91 : vector<1x20xi1>, vector<1x20xf32>
    %cst_39 = arith.constant dense<0.000000e+00> : vector<1xf32>
    %93 = vector.multi_reduction <add>, %92, %cst_39 [1] : vector<1x20xf32> to vector<1xf32>
    %94 = vector.shape_cast %93 : vector<1xf32> to vector<1x1xf32>
    %95 = arith.mulf %52, %52 : vector<1x1xf32>
    %96 = arith.subf %94, %95 : vector<1x1xf32>
    %97 = arith.mulf %79, %79 : vector<1x1xf32>
    %98 = arith.subf %96, %97 : vector<1x1xf32>
    %99 = math.sqrt %98 : vector<1x1xf32>
    %cst_40 = arith.constant 1.000000e+00 : f32
    %100 = vector.broadcast %cst_40 : f32 to vector<1x1xf32>
    %101 = arith.divf %100, %99 : vector<1x1xf32>
    %c5_i32 = arith.constant 5 : i32
    %102 = vector.broadcast %c5_i32 : i32 to vector<1x20xi32>
    %103 = arith.cmpi eq, %20, %102 : vector<1x20xi32>
    %cst_41 = arith.constant 0.000000e+00 : f32
    %104 = vector.broadcast %cst_41 : f32 to vector<1x20xf32>
    %105 = arith.select %103, %28, %104 : vector<1x20xi1>, vector<1x20xf32>
    %cst_42 = arith.constant dense<0.000000e+00> : vector<1xf32>
    %106 = vector.multi_reduction <add>, %105, %cst_42 [1] : vector<1x20xf32> to vector<1xf32>
    %107 = vector.shape_cast %106 : vector<1xf32> to vector<1x1xf32>
    %108 = arith.mulf %59, %52 : vector<1x1xf32>
    %109 = arith.subf %107, %108 : vector<1x1xf32>
    %110 = arith.mulf %88, %79 : vector<1x1xf32>
    %111 = arith.subf %109, %110 : vector<1x1xf32>
    %112 = arith.mulf %111, %101 : vector<1x1xf32>
    %c4_i32_43 = arith.constant 4 : i32
    %113 = vector.broadcast %c4_i32_43 : i32 to vector<1x20xi32>
    %114 = arith.cmpi eq, %20, %113 : vector<1x20xi32>
    %cst_44 = arith.constant 0.000000e+00 : f32
    %115 = vector.broadcast %cst_44 : f32 to vector<1x20xf32>
    %116 = arith.select %114, %28, %115 : vector<1x20xi1>, vector<1x20xf32>
    %cst_45 = arith.constant dense<0.000000e+00> : vector<1xf32>
    %117 = vector.multi_reduction <add>, %116, %cst_45 [1] : vector<1x20xf32> to vector<1xf32>
    %118 = vector.shape_cast %117 : vector<1xf32> to vector<1x1xf32>
    %119 = arith.mulf %59, %59 : vector<1x1xf32>
    %120 = arith.subf %118, %119 : vector<1x1xf32>
    %121 = arith.mulf %88, %88 : vector<1x1xf32>
    %122 = arith.subf %120, %121 : vector<1x1xf32>
    %123 = arith.mulf %112, %112 : vector<1x1xf32>
    %124 = arith.subf %122, %123 : vector<1x1xf32>
    %125 = math.sqrt %124 : vector<1x1xf32>
    %c0_46 = arith.constant 0 : index
    %c0_47 = arith.constant 0 : index
    %126 = vector.load %arg1[%c0_46, %c0_47] : memref<1x4xf32, #tpu.memory_space<vmem>>, vector<1x4xf32>
    %127 = tpu.iota {dimensions = array<i32: 1>} : vector<1x4xi32>
    %c0_i32 = arith.constant 0 : i32
    %128 = vector.broadcast %c0_i32 : i32 to vector<1x4xi32>
    %129 = arith.cmpi eq, %127, %128 : vector<1x4xi32>
    %cst_48 = arith.constant 0.000000e+00 : f32
    %130 = vector.broadcast %cst_48 : f32 to vector<1x4xf32>
    %131 = arith.select %129, %126, %130 : vector<1x4xi1>, vector<1x4xf32>
    %cst_49 = arith.constant dense<0.000000e+00> : vector<1xf32>
    %132 = vector.multi_reduction <add>, %131, %cst_49 [1] : vector<1x4xf32> to vector<1xf32>
    %133 = vector.shape_cast %132 : vector<1xf32> to vector<1x1xf32>
    %134 = arith.divf %133, %125 : vector<1x1xf32>
    %c1_i32 = arith.constant 1 : i32
    %135 = vector.broadcast %c1_i32 : i32 to vector<1x4xi32>
    %136 = arith.cmpi eq, %127, %135 : vector<1x4xi32>
    %cst_50 = arith.constant 0.000000e+00 : f32
    %137 = vector.broadcast %cst_50 : f32 to vector<1x4xf32>
    %138 = arith.select %136, %126, %137 : vector<1x4xi1>, vector<1x4xf32>
    %cst_51 = arith.constant dense<0.000000e+00> : vector<1xf32>
    %139 = vector.multi_reduction <add>, %138, %cst_51 [1] : vector<1x4xf32> to vector<1xf32>
    %140 = vector.shape_cast %139 : vector<1xf32> to vector<1x1xf32>
    %141 = arith.mulf %112, %134 : vector<1x1xf32>
    %142 = arith.subf %140, %141 : vector<1x1xf32>
    %143 = arith.divf %142, %99 : vector<1x1xf32>
    %c2_i32 = arith.constant 2 : i32
    %144 = vector.broadcast %c2_i32 : i32 to vector<1x4xi32>
    %145 = arith.cmpi eq, %127, %144 : vector<1x4xi32>
    %cst_52 = arith.constant 0.000000e+00 : f32
    %146 = vector.broadcast %cst_52 : f32 to vector<1x4xf32>
    %147 = arith.select %145, %126, %146 : vector<1x4xi1>, vector<1x4xf32>
    %cst_53 = arith.constant dense<0.000000e+00> : vector<1xf32>
    %148 = vector.multi_reduction <add>, %147, %cst_53 [1] : vector<1x4xf32> to vector<1xf32>
    %149 = vector.shape_cast %148 : vector<1xf32> to vector<1x1xf32>
    %150 = arith.mulf %88, %134 : vector<1x1xf32>
    %151 = arith.subf %149, %150 : vector<1x1xf32>
    %152 = arith.mulf %79, %143 : vector<1x1xf32>
    %153 = arith.subf %151, %152 : vector<1x1xf32>
    %154 = arith.divf %153, %68 : vector<1x1xf32>
    %c3_i32 = arith.constant 3 : i32
    %155 = vector.broadcast %c3_i32 : i32 to vector<1x4xi32>
    %156 = arith.cmpi eq, %127, %155 : vector<1x4xi32>
    %cst_54 = arith.constant 0.000000e+00 : f32
    %157 = vector.broadcast %cst_54 : f32 to vector<1x4xf32>
    %158 = arith.select %156, %126, %157 : vector<1x4xi1>, vector<1x4xf32>
    %cst_55 = arith.constant dense<0.000000e+00> : vector<1xf32>
    %159 = vector.multi_reduction <add>, %158, %cst_55 [1] : vector<1x4xf32> to vector<1xf32>
    %160 = vector.shape_cast %159 : vector<1xf32> to vector<1x1xf32>
    %161 = arith.mulf %59, %134 : vector<1x1xf32>
    %162 = arith.subf %160, %161 : vector<1x1xf32>
    %163 = arith.mulf %52, %143 : vector<1x1xf32>
    %164 = arith.subf %162, %163 : vector<1x1xf32>
    %165 = arith.mulf %45, %154 : vector<1x1xf32>
    %166 = arith.subf %164, %165 : vector<1x1xf32>
    %167 = arith.divf %166, %36 : vector<1x1xf32>
    %cst_56 = arith.constant 0.000000e+00 : f32
    %168 = vector.broadcast %cst_56 : f32 to vector<1x4xf32>
    %c0_i32_57 = arith.constant 0 : i32
    %169 = vector.broadcast %c0_i32_57 : i32 to vector<1x4xi32>
    %170 = arith.cmpi eq, %127, %169 : vector<1x4xi32>
    %171 = vector.shape_cast %134 : vector<1x1xf32> to vector<1x1xf32>
    %172 = vector.broadcast %171 : vector<1x1xf32> to vector<1x4xf32>
    %173 = arith.select %170, %172, %168 : vector<1x4xi1>, vector<1x4xf32>
    %c1_i32_58 = arith.constant 1 : i32
    %174 = vector.broadcast %c1_i32_58 : i32 to vector<1x4xi32>
    %175 = arith.cmpi eq, %127, %174 : vector<1x4xi32>
    %176 = vector.shape_cast %143 : vector<1x1xf32> to vector<1x1xf32>
    %177 = vector.broadcast %176 : vector<1x1xf32> to vector<1x4xf32>
    %178 = arith.select %175, %177, %173 : vector<1x4xi1>, vector<1x4xf32>
    %c2_i32_59 = arith.constant 2 : i32
    %179 = vector.broadcast %c2_i32_59 : i32 to vector<1x4xi32>
    %180 = arith.cmpi eq, %127, %179 : vector<1x4xi32>
    %181 = vector.shape_cast %154 : vector<1x1xf32> to vector<1x1xf32>
    %182 = vector.broadcast %181 : vector<1x1xf32> to vector<1x4xf32>
    %183 = arith.select %180, %182, %178 : vector<1x4xi1>, vector<1x4xf32>
    %c3_i32_60 = arith.constant 3 : i32
    %184 = vector.broadcast %c3_i32_60 : i32 to vector<1x4xi32>
    %185 = arith.cmpi eq, %127, %184 : vector<1x4xi32>
    %186 = vector.shape_cast %167 : vector<1x1xf32> to vector<1x1xf32>
    %187 = vector.broadcast %186 : vector<1x1xf32> to vector<1x4xf32>
    %188 = arith.select %185, %187, %183 : vector<1x4xi1>, vector<1x4xf32>
    %189 = vector.extract_strided_slice %28 {offsets = [0, 0], sizes = [1, 4], strides = [1, 1]} : vector<1x20xf32> to vector<1x4xf32>
    %190 = arith.addf %189, %188 : vector<1x4xf32>
    %c0_61 = arith.constant 0 : index
    %c0_62 = arith.constant 0 : index
    %191 = vector.load %arg2[%c0_61, %c0_62] : memref<1x4xf32, #tpu.memory_space<vmem>>, vector<1x4xf32>
    %192 = arith.mulf %190, %191 : vector<1x4xf32>
    %c0_63 = arith.constant 0 : index
    %c0_64 = arith.constant 0 : index
    %193 = vector.load %arg3[%c0_63, %c0_64] : memref<1x4xf32, #tpu.memory_space<vmem>>, vector<1x4xf32>
    %194 = arith.addf %192, %193 : vector<1x4xf32>
    %c0_65 = arith.constant 0 : index
    %c0_66 = arith.constant 0 : index
    %195 = vector.load %arg11[%c0_65, %c0_66] : memref<1x5xf32, #tpu.memory_space<vmem>>, vector<1x4xf32>
    tpu.vector_store %arg11[%c0_65, %c0_66], %194 {strides = array<i32>} : memref<1x5xf32, #tpu.memory_space<vmem>>, vector<1x4xf32>,
    %196 = arith.mulf %126, %126 : vector<1x4xf32>
    %cst_67 = arith.constant dense<0.000000e+00> : vector<1xf32>
    %197 = vector.multi_reduction <add>, %196, %cst_67 [1] : vector<1x4xf32> to vector<1xf32>
    %198 = vector.shape_cast %197 : vector<1xf32> to vector<1x1xf32>
    %cst_68 = arith.constant 0.000000e+00 : f32
    %199 = vector.broadcast %cst_68 : f32 to vector<1x1xf32>
    %200 = math.log %36 : vector<1x1xf32>
    %201 = arith.subf %199, %200 : vector<1x1xf32>
    %202 = math.log %68 : vector<1x1xf32>
    %203 = arith.subf %201, %202 : vector<1x1xf32>
    %204 = math.log %99 : vector<1x1xf32>
    %205 = arith.subf %203, %204 : vector<1x1xf32>
    %206 = math.log %125 : vector<1x1xf32>
    %207 = arith.subf %205, %206 : vector<1x1xf32>
    %cst_69 = arith.constant 7.35150814 : f32
    %208 = vector.broadcast %cst_69 : f32 to vector<1x1xf32>
    %209 = arith.addf %208, %198 : vector<1x1xf32>
    %cst_70 = arith.constant -5.000000e-01 : f32
    %210 = vector.broadcast %cst_70 : f32 to vector<1x1xf32>
    %211 = arith.mulf %210, %209 : vector<1x1xf32>
    %212 = arith.subf %211, %207 : vector<1x1xf32>
    %c0_71 = arith.constant 0 : index
    %c4 = arith.constant 4 : index
    %213 = vector.load %arg11[%c0_71, %c4] : memref<1x5xf32, #tpu.memory_space<vmem>>, vector<1x1xf32>
    tpu.vector_store %arg11[%c0_71, %c4], %212 {strides = array<i32>} : memref<1x5xf32, #tpu.memory_space<vmem>>, vector<1x1xf32>,
    return
  }
}

</mosaic_0001>

<llo_original>
// kernel: squeeze.11
$region0: #{squeeze.11}
  %s0 = inlined_call_operand.vmem [shape: f32[16], index: 0, kind: input, shape index: {}]
  %s1 = inlined_call_operand.hbm [shape: f32[4,4], index: 1, kind: output, shape index: {}]
  $region1: #{squeeze.11} parent=0
    #allocation0 [shape = 'u8[2048]{0}', space=vmem, size = 0x800, scoped, tag = 'operand span for operand 1']
    #allocation1 [shape = 's32[1]{0}', space=sflag, size = 0x4, scoped, tag = 'scoped memory for squeeze.11']
    #allocation2 [shape = 'u8[4096]{0}', space=vmem, size = 0x1000, scoped, tag = 'scoped mem for output reshape']
    #allocation3 [shape = 'u8[4096]{0}', space=vmem, size = 0x1000, scoped, tag = 'scoped mem for input reshape']
    %2 = vsyncpa [#allocation1], 0
    %s4 = sshll.u32 1, 1
    %s5 = ssub.s32 %s4, 1
    %v6 = vld [vmem:[%s0] sm:%s5]
    %7 = vst [vmem:[#allocation3] sm:%s5] %v6
    %v8 = vld [vmem:[#allocation3] sm:$0x1]
    %vm9 = vcmask 31744
    %10 = vst.msk [vmem:[#allocation2] sm:$0x1] %vm9, %v8
    %v11 = vld [vmem:[#allocation3] sm:$0x1]
    %12 = vrot.lane.b32.xlu0 %v11, 124
    %v13 = vpop.permute.xlu0 %12
    %vm14 = vcmask 31744
    %s15 = scalar_lea.vmem [#allocation2], 1
    %16 = vst.msk [vmem:[%s15] sm:$0x1] %vm14, %v13
    %v17 = vld [vmem:[#allocation3] sm:$0x1]
    %18 = vrot.lane.b32.xlu0 %v17, 120
    %v19 = vpop.permute.xlu0 %18
    %vm20 = vcmask 31744
    %s21 = scalar_lea.vmem [#allocation2], 2
    %22 = vst.msk [vmem:[%s21] sm:$0x1] %vm20, %v19
    %v23 = vld [vmem:[#allocation3] sm:$0x1]
    %24 = vrot.lane.b32.xlu0 %v23, 116
    %v25 = vpop.permute.xlu0 %24
    %vm26 = vcmask 31744
    %s27 = scalar_lea.vmem [#allocation2], 3
    %28 = vst.msk [vmem:[%s27] sm:$0x1] %vm26, %v25
    %s30 = sshll.u32 1, 4
    %s31 = ssub.s32 %s30, 1
    %v33 = vld [vmem:[#allocation2] sm:%s31]
    %s34 = sshll.u32 1, 4
    %s35 = ssub.s32 %s34, 1
    %36 = vst [vmem:[#allocation0] sm:%s35] %v33
    %s38 = ssub.s32 64, 64
    %39 = vsyncadd [#allocation1], %s38
    %s41 = sshll.u32 [#allocation0], 4
    %s42 = int_to_ptr.vmem [resolvable:$true] %s41
    %44 = dma.vmem_to_hbm [thread:$0]  %s42, 64, %s1, [#allocation1]
    %45 = dma.done [#allocation1], 64
    %46 = vsyncpa [#allocation1], 1

// kernel: learnable_gaussian_forward.1
$region0: #{learnable_gaussian_forward.1}
  #allocation0 [shape = 'u32[]', space=smem, size = 0x4, offset = 0x4, fixed_abs, tag = 'smem constant byte address 0x4 - core index']
  #allocation1 [shape = 'u32[144,128]{1,0:T(1,128)}', space=vmem, size = 0x12000, scoped, tag = 'internal scratch']
  %s0 = inlined_call_operand.vmem [shape: f32[1,20], index: 0, kind: input, shape index: {}, may-alias: {0,10}]
  %s1 = inlined_call_operand.vmem [shape: f32[1,4], index: 1, kind: input, shape index: {}]
  %s2 = inlined_call_operand.vmem [shape: f32[1,4], index: 2, kind: input, shape index: {}]
  %s3 = inlined_call_operand.vmem [shape: f32[1,4], index: 3, kind: input, shape index: {}]
  %s4 = inlined_call_operand.vmem [shape: f32[20,256], index: 4, kind: input, shape index: {}]
  %s5 = inlined_call_operand.vmem [shape: f32[1,256], index: 5, kind: input, shape index: {}]
  %s6 = inlined_call_operand.hbm [shape: f32[256,256], index: 6, kind: input, shape index: {}]
  %s7 = inlined_call_operand.vmem [shape: f32[1,256], index: 7, kind: input, shape index: {}]
  %s8 = inlined_call_operand.vmem [shape: f32[256,20], index: 8, kind: input, shape index: {}]
  %s9 = inlined_call_operand.vmem [shape: f32[1,20], index: 9, kind: input, shape index: {}]
  %s10 = inlined_call_operand.vmem [shape: f32[1,20], index: 10, kind: output, shape index: {0}, may-alias: {0,10}]
  %s11 = inlined_call_operand.vmem [shape: f32[1,5], index: 11, kind: output, shape index: {1}]
  %12 = xla_tuple %s10, %s11
  %s13 = sld [smem:[#allocation0]]
  $region62: #{learnable_gaussian_forward.1} parent=0
    _
  %s15 = ssub.s32 1, %s13
  %s16 = scalar_select 0, %s15, %s13
  $region1: #{learnable_gaussian_forward.1} parent=0
    #allocation2 [shape = 'u8[262144]{0}', space=vmem, size = 0x40000, scoped, tag = 'input window, operand 6, single buffered']
    #allocation3 [shape = 's32[1]{0}', space=sflag, size = 0x4, scoped, tag = 'scoped memory for learnable_gaussian_forward.1']
    %17 = vsyncpa [#allocation3], 0
    // Predicated region
    $region2: #{learnable_gaussian_forward.1} parent=1 // pred_check
      _
    $region3: #{learnable_gaussian_forward.1} parent=1 // pred_check_branch
      %19 = sbr.rel (0) target = $region5
    $region4: #{learnable_gaussian_forward.1} parent=1 // pred_region
      _
    $region5: #{learnable_gaussian_forward.1} parent=1 // pred_fallthru
      _
    // Predicated region
    $region6: #{learnable_gaussian_forward.1} parent=1 // pred_check
      _
    $region7: #{learnable_gaussian_forward.1} parent=1 // pred_check_branch
      %21 = sbr.rel (0) target = $region9
    $region8: #{learnable_gaussian_forward.1} parent=1 // pred_region
      _
    $region9: #{learnable_gaussian_forward.1} parent=1 // pred_fallthru
      _
    // Predicated region
    $region10: #{learnable_gaussian_forward.1} parent=1 // pred_check
      _
    $region11: #{learnable_gaussian_forward.1} parent=1 // pred_check_branch
      %23 = sbr.rel (0) target = $region13
    $region12: #{learnable_gaussian_forward.1} parent=1 // pred_region
      _
    $region13: #{learnable_gaussian_forward.1} parent=1 // pred_fallthru
      _
    // Predicated region
    $region14: #{learnable_gaussian_forward.1} parent=1 // pred_check
      _
    $region15: #{learnable_gaussian_forward.1} parent=1 // pred_check_branch
      %25 = sbr.rel (0) target = $region17
    $region16: #{learnable_gaussian_forward.1} parent=1 // pred_region
      _
    $region17: #{learnable_gaussian_forward.1} parent=1 // pred_fallthru
      _
    // Predicated region
    $region18: #{learnable_gaussian_forward.1} parent=1 // pred_check
      _
    $region19: #{learnable_gaussian_forward.1} parent=1 // pred_check_branch
      %27 = sbr.rel (0) target = $region21
    $region20: #{learnable_gaussian_forward.1} parent=1 // pred_region
      _
    $region21: #{learnable_gaussian_forward.1} parent=1 // pred_fallthru
      _
    // Predicated region
    $region22: #{learnable_gaussian_forward.1} parent=1 // pred_check
      _
    $region23: #{learnable_gaussian_forward.1} parent=1 // pred_check_branch
      %29 = sbr.rel (0) target = $region25
    $region24: #{learnable_gaussian_forward.1} parent=1 // pred_region
      _
    $region25: #{learnable_gaussian_forward.1} parent=1 // pred_fallthru
      _
    // Predicated region
    $region26: #{learnable_gaussian_forward.1} parent=1 // pred_check
      _
    $region27: #{learnable_gaussian_forward.1} parent=1 // pred_check_branch
      %31 = sbr.rel (0) target = $region29
    $region28: #{learnable_gaussian_forward.1} parent=1 // pred_region
      %s33 = ssub.s32 8192, 8192
      %34 = vsyncadd [#allocation3], %s33
      %s35 = sshll.u32 [#allocation2], 4
      %s36 = int_to_ptr.vmem [resolvable:$true] %s35
      %41 = dma.hbm_to_vmem [thread:$0]  %s6, 8192, %s36, [#allocation3], 256, 256, 16
    $region29: #{learnable_gaussian_forward.1} parent=1 // pred_fallthru
      _
    // Predicated region
    $region30: #{learnable_gaussian_forward.1} parent=1 // pred_check
      _
    $region31: #{learnable_gaussian_forward.1} parent=1 // pred_check_branch
      %43 = sbr.rel (0) target = $region33
    $region32: #{learnable_gaussian_forward.1} parent=1 // pred_region
      _
    $region33: #{learnable_gaussian_forward.1} parent=1 // pred_fallthru
      _
    // Predicated region
    $region34: #{learnable_gaussian_forward.1} parent=1 // pred_check
      _
    $region35: #{learnable_gaussian_forward.1} parent=1 // pred_check_branch
      %45 = sbr.rel (0) target = $region37
    $region36: #{learnable_gaussian_forward.1} parent=1 // pred_region
      _
    $region37: #{learnable_gaussian_forward.1} parent=1 // pred_fallthru
      _
    // Predicated region
    $region38: #{learnable_gaussian_forward.1} parent=1 // pred_check
      _
    $region39: #{learnable_gaussian_forward.1} parent=1 // pred_check_branch
      %47 = sbr.rel (0) target = $region41
    $region40: #{learnable_gaussian_forward.1} parent=1 // pred_region
      _
    $region41: #{learnable_gaussian_forward.1} parent=1 // pred_fallthru
      _
    // Predicated region
    $region42: #{learnable_gaussian_forward.1} parent=1 // pred_check
      _
    $region43: #{learnable_gaussian_forward.1} parent=1 // pred_check_branch
      %49 = sbr.rel (0) target = $region45
    $region44: #{learnable_gaussian_forward.1} parent=1 // pred_region
      %50 = dma.done [#allocation3], 8192
    $region45: #{learnable_gaussian_forward.1} parent=1 // pred_fallthru
      _
    %v51 = vld [vmem:[%s0] sm:$0x1]
    %v52 = vld [vmem:[%s4] sm:$0xff]
    %v53 = vld [vmem:[%s4 + $0x8] sm:$0xff]
    %v54 = vld [vmem:[%s4 + $0x10] sm:$0xff]
    %v55 = vld [vmem:[%s4 + $0x18] sm:$0xff]
    %v56 = vld [vmem:[%s4 + $0x20] sm:$0xf]
    %v57 = vld [vmem:[%s4 + $0x28] sm:$0xf]
    %v58 = vld [vmem:[%s5] sm:$0x3]
    %v60 = vlaneseq
    %v61 = vshrl.u32 %v60, 7
    %v62 = vsub.s32 0, %v61
    %v63 = vrot.slane %v58, %v62
    %v64 = vlaneseq
    %v65 = vshrl.u32 %v64, 7
    %v66 = vsub.s32 1, %v65
    %v67 = vrot.slane %v58, %v66
    %vm70 = vcmask 162816
    %v72 = vsel %vm70, %v51, 0
    %vm74 = vcmask 1043456
    %v76 = vsel %vm74, %v56, 0
    %v79 = vsel %vm74, %v57, 0
    %81 = vmatprep.subr.mxu0 0.0
    %82 = vmatpush1.msra.mxu0 0.0
    %83 = vmatprep.subr.mxu0 0.0
    %84 = vmatpush1.msra.mxu0 0.0
    %85 = vmatprep.subr.mxu0 0.0
    %86 = vmatpush1.msra.mxu0 0.0
    %87 = vmatprep.subr.mxu0 0.0
    %88 = vmatpush1.msra.mxu0 0.0
    %89 = vmatprep.subr.mxu0 0.0
    %90 = vmatpush1.msra.mxu0 0.0
    %91 = vmatprep.subr.mxu0 0.0
    %92 = vmatpush1.msra.mxu0 0.0
    %93 = vmatprep.subr.mxu0 0.0
    %94 = vmatpush1.msra.mxu0 0.0
    %95 = vmatprep.subr.mxu0 0.0
    %96 = vmatpush1.msra.mxu0 0.0
    %97 = vmatprep.subr.mxu0 0.0
    %98 = vmatpush1.msra.mxu0 0.0
    %99 = vmatprep.subr.mxu0 0.0
    %100 = vmatpush1.msra.mxu0 0.0
    %101 = vmatprep.subr.mxu0 0.0
    %102 = vmatpush1.msra.mxu0 0.0
    %103 = vmatprep.subr.mxu0 0.0
    %104 = vmatpush1.msra.mxu0 0.0
    %105 = vmatprep.subr.mxu0 0.0
    %106 = vmatpush1.msra.mxu0 0.0
    %107 = vmatprep.subr.mxu0 %v79
    %108 = vmatpush1.msra.mxu0 %v76
    %109 = vmatprep.subr.mxu0 %v55
    %110 = vmatpush1.msra.mxu0 %v54
    %111 = vmatprep.subr.mxu0 %v53
    %112 = vmatpush1.msra.mxu0 %v52
    %113 = vmatprep.subr.mxu0 0.0
    %114 = vmatpush2.msra.mxu0 0.0
    %115 = vmatprep.subr.mxu0 0.0
    %116 = vmatpush2.msra.mxu0 0.0
    %117 = vmatprep.subr.mxu0 0.0
    %118 = vmatpush2.msra.mxu0 0.0
    %119 = vmatprep.subr.mxu0 0.0
    %120 = vmatpush2.msra.mxu0 0.0
    %121 = vmatprep.subr.mxu0 0.0
    %122 = vmatpush2.msra.mxu0 0.0
    %123 = vmatprep.subr.mxu0 0.0
    %124 = vmatpush2.msra.mxu0 0.0
    %125 = vmatprep.subr.mxu0 0.0
    %126 = vmatpush2.msra.mxu0 0.0
    %127 = vmatprep.subr.mxu0 0.0
    %128 = vmatpush2.msra.mxu0 0.0
    %129 = vmatprep.subr.mxu0 0.0
    %130 = vmatpush2.msra.mxu0 0.0
    %131 = vmatprep.subr.mxu0 0.0
    %132 = vmatpush2.msra.mxu0 0.0
    %133 = vmatprep.subr.mxu0 0.0
    %134 = vmatpush2.msra.mxu0 0.0
    %135 = vmatprep.subr.mxu0 0.0
    %136 = vmatpush2.msra.mxu0 0.0
    %137 = vmatprep.subr.mxu0 0.0
    %138 = vmatpush2.msra.mxu0 0.0
    %139 = vmatprep.subr.mxu0 0.0
    %140 = vmatpush2.msra.mxu0 0.0
    %141 = vmatprep.subr.mxu0 0.0
    %142 = vmatpush2.msra.mxu0 0.0
    %143 = vmatprep.subr.mxu0 0.0
    %144 = vmatpush2.msra.mxu0 0.0
    %145 = vmatprep.mubr.f32.mxu0 0.0
    %146 = vmatmul.mubr.f32.gmra.mxu0 %v72
    %v147 = vpop.f32.mrf.mxu0
    %v148 = vadd.f32 %v63, %v147
    %v149 = vpop.f32.mrf.mxu0
    %v150 = vadd.f32 %v67, %v149
    %151 = vdwg.mxu0
    %v152 = vmax.f32 %v148, 0.0
    %v153 = vmax.f32 %v150, 0.0
    %v154 = vld [vmem:[#allocation2] sm:$0xff]
    %v155 = vld [vmem:[#allocation2 + $0x8] sm:$0xff]
    %v156 = vld [vmem:[#allocation2 + $0x10] sm:$0xff]
    %v157 = vld [vmem:[#allocation2 + $0x18] sm:$0xff]
    %v158 = vld [vmem:[#allocation2 + $0x20] sm:$0xff]
    %v159 = vld [vmem:[#allocation2 + $0x28] sm:$0xff]
    %v160 = vld [vmem:[#allocation2 + $0x30] sm:$0xff]
    %v161 = vld [vmem:[#allocation2 + $0x38] sm:$0xff]
    %v162 = vld [vmem:[#allocation2 + $0x40] sm:$0xff]
    %v163 = vld [vmem:[#allocation2 + $0x48] sm:$0xff]
    %v164 = vld [vmem:[#allocation2 + $0x50] sm:$0xff]
    %v165 = vld [vmem:[#allocation2 + $0x58] sm:$0xff]
    %v166 = vld [vmem:[#allocation2 + $0x60] sm:$0xff]
    %v167 = vld [vmem:[#allocation2 + $0x68] sm:$0xff]
    %v168 = vld [vmem:[#allocation2 + $0x70] sm:$0xff]
    %v169 = vld [vmem:[#allocation2 + $0x78] sm:$0xff]
    %v170 = vld [vmem:[#allocation2 + $0x80] sm:$0xff]
    %v171 = vld [vmem:[#allocation2 + $0x88] sm:$0xff]
    %v172 = vld [vmem:[#allocation2 + $0x90] sm:$0xff]
    %v173 = vld [vmem:[#allocation2 + $0x98] sm:$0xff]
    %v174 = vld [vmem:[#allocation2 + $0xa0] sm:$0xff]
    %v175 = vld [vmem:[#allocation2 + $0xa8] sm:$0xff]
    %v176 = vld [vmem:[#allocation2 + $0xb0] sm:$0xff]
    %v177 = vld [vmem:[#allocation2 + $0xb8] sm:$0xff]
    %v178 = vld [vmem:[#allocation2 + $0xc0] sm:$0xff]
    %v179 = vld [vmem:[#allocation2 + $0xc8] sm:$0xff]
    %v180 = vld [vmem:[#allocation2 + $0xd0] sm:$0xff]
    %v181 = vld [vmem:[#allocation2 + $0xd8] sm:$0xff]
    %v182 = vld [vmem:[#allocation2 + $0xe0] sm:$0xff]
    %v183 = vld [vmem:[#allocation2 + $0xe8] sm:$0xff]
    %v184 = vld [vmem:[#allocation2 + $0xf0] sm:$0xff]
    %v185 = vld [vmem:[#allocation2 + $0xf8] sm:$0xff]
    %v186 = vld [vmem:[#allocation2 + $0x100] sm:$0xff]
    %v187 = vld [vmem:[#allocation2 + $0x108] sm:$0xff]
    %v188 = vld [vmem:[#allocation2 + $0x110] sm:$0xff]
    %v189 = vld [vmem:[#allocation2 + $0x118] sm:$0xff]
    %v190 = vld [vmem:[#allocation2 + $0x120] sm:$0xff]
    %v191 = vld [vmem:[#allocation2 + $0x128] sm:$0xff]
    %v192 = vld [vmem:[#allocation2 + $0x130] sm:$0xff]
    %v193 = vld [vmem:[#allocation2 + $0x138] sm:$0xff]
    %v194 = vld [vmem:[#allocation2 + $0x140] sm:$0xff]
    %v195 = vld [vmem:[#allocation2 + $0x148] sm:$0xff]
    %v196 = vld [vmem:[#allocation2 + $0x150] sm:$0xff]
    %v197 = vld [vmem:[#allocation2 + $0x158] sm:$0xff]
    %v198 = vld [vmem:[#allocation2 + $0x160] sm:$0xff]
    %v199 = vld [vmem:[#allocation2 + $0x168] sm:$0xff]
    %v200 = vld [vmem:[#allocation2 + $0x170] sm:$0xff]
    %v201 = vld [vmem:[#allocation2 + $0x178] sm:$0xff]
    %v202 = vld [vmem:[#allocation2 + $0x180] sm:$0xff]
    %v203 = vld [vmem:[#allocation2 + $0x188] sm:$0xff]
    %v204 = vld [vmem:[#allocation2 + $0x190] sm:$0xff]
    %v205 = vld [vmem:[#allocation2 + $0x198] sm:$0xff]
    %v206 = vld [vmem:[#allocation2 + $0x1a0] sm:$0xff]
    %v207 = vld [vmem:[#allocation2 + $0x1a8] sm:$0xff]
    %v208 = vld [vmem:[#allocation2 + $0x1b0] sm:$0xff]
    %v209 = vld [vmem:[#allocation2 + $0x1b8] sm:$0xff]
    %v210 = vld [vmem:[#allocation2 + $0x1c0] sm:$0xff]
    %v211 = vld [vmem:[#allocation2 + $0x1c8] sm:$0xff]
    %v212 = vld [vmem:[#allocation2 + $0x1d0] sm:$0xff]
    %v213 = vld [vmem:[#allocation2 + $0x1d8] sm:$0xff]
    %v214 = vld [vmem:[#allocation2 + $0x1e0] sm:$0xff]
    %v215 = vld [vmem:[#allocation2 + $0x1e8] sm:$0xff]
    %v216 = vld [vmem:[#allocation2 + $0x1f0] sm:$0xff]
    %v217 = vld [vmem:[#allocation2 + $0x1f8] sm:$0xff]
    %v218 = vld [vmem:[%s7] sm:$0x3]
    %v220 = vlaneseq
    %v221 = vshrl.u32 %v220, 7
    %v222 = vsub.s32 0, %v221
    %v223 = vrot.slane %v218, %v222
    %v224 = vlaneseq
    %v225 = vshrl.u32 %v224, 7
    %v226 = vsub.s32 1, %v225
    %v227 = vrot.slane %v218, %v226
    %230 = vmatprep.subr.mxu0 %v185
    %231 = vmatpush1.msra.mxu0 %v184
    %232 = vmatprep.subr.mxu0 %v183
    %233 = vmatpush1.msra.mxu0 %v182
    %234 = vmatprep.subr.mxu0 %v181
    %235 = vmatpush1.msra.mxu0 %v180
    %236 = vmatprep.subr.mxu0 %v179
    %237 = vmatpush1.msra.mxu0 %v178
    %238 = vmatprep.subr.mxu0 %v177
    %239 = vmatpush1.msra.mxu0 %v176
    %240 = vmatprep.subr.mxu0 %v175
    %241 = vmatpush1.msra.mxu0 %v174
    %242 = vmatprep.subr.mxu0 %v173
    %243 = vmatpush1.msra.mxu0 %v172
    %244 = vmatprep.subr.mxu0 %v171
    %245 = vmatpush1.msra.mxu0 %v170
    %246 = vmatprep.subr.mxu0 %v169
    %247 = vmatpush1.msra.mxu0 %v168
    %248 = vmatprep.subr.mxu0 %v167
    %249 = vmatpush1.msra.mxu0 %v166
    %250 = vmatprep.subr.mxu0 %v165
    %251 = vmatpush1.msra.mxu0 %v164
    %252 = vmatprep.subr.mxu0 %v163
    %253 = vmatpush1.msra.mxu0 %v162
    %254 = vmatprep.subr.mxu0 %v161
    %255 = vmatpush1.msra.mxu0 %v160
    %256 = vmatprep.subr.mxu0 %v159
    %257 = vmatpush1.msra.mxu0 %v158
    %258 = vmatprep.subr.mxu0 %v157
    %259 = vmatpush1.msra.mxu0 %v156
    %260 = vmatprep.subr.mxu0 %v155
    %261 = vmatpush1.msra.mxu0 %v154
    %262 = vmatprep.subr.mxu0 %v217
    %263 = vmatpush2.msra.mxu0 %v216
    %264 = vmatprep.subr.mxu0 %v215
    %265 = vmatpush2.msra.mxu0 %v214
    %266 = vmatprep.subr.mxu0 %v213
    %267 = vmatpush2.msra.mxu0 %v212
    %268 = vmatprep.subr.mxu0 %v211
    %269 = vmatpush2.msra.mxu0 %v210
    %270 = vmatprep.subr.mxu0 %v209
    %271 = vmatpush2.msra.mxu0 %v208
    %272 = vmatprep.subr.mxu0 %v207
    %273 = vmatpush2.msra.mxu0 %v206
    %274 = vmatprep.subr.mxu0 %v205
    %275 = vmatpush2.msra.mxu0 %v204
    %276 = vmatprep.subr.mxu0 %v203
    %277 = vmatpush2.msra.mxu0 %v202
    %278 = vmatprep.subr.mxu0 %v201
    %279 = vmatpush2.msra.mxu0 %v200
    %280 = vmatprep.subr.mxu0 %v199
    %281 = vmatpush2.msra.mxu0 %v198
    %282 = vmatprep.subr.mxu0 %v197
    %283 = vmatpush2.msra.mxu0 %v196
    %284 = vmatprep.subr.mxu0 %v195
    %285 = vmatpush2.msra.mxu0 %v194
    %286 = vmatprep.subr.mxu0 %v193
    %287 = vmatpush2.msra.mxu0 %v192
    %288 = vmatprep.subr.mxu0 %v191
    %289 = vmatpush2.msra.mxu0 %v190
    %290 = vmatprep.subr.mxu0 %v189
    %291 = vmatpush2.msra.mxu0 %v188
    %292 = vmatprep.subr.mxu0 %v187
    %293 = vmatpush2.msra.mxu0 %v186
    %294 = vmatprep.mubr.f32.mxu0 %v153
    %295 = vmatmul.mubr.f32.gmra.mxu0 %v152
    %v296 = vpop.f32.mrf.mxu0
    %v297 = vadd.f32 %v223, %v296
    %v298 = vpop.f32.mrf.mxu0
    %v299 = vadd.f32 %v227, %v298
    %300 = vdwg.mxu0
    %v301 = vmax.f32 %v297, 0.0
    %v302 = vmax.f32 %v299, 0.0
    %v303 = vld [vmem:[%s8] sm:$0xff]
    %v304 = vld [vmem:[%s8 + $0x8] sm:$0xff]
    %v305 = vld [vmem:[%s8 + $0x10] sm:$0xff]
    %v306 = vld [vmem:[%s8 + $0x18] sm:$0xff]
    %v307 = vld [vmem:[%s8 + $0x20] sm:$0xff]
    %v308 = vld [vmem:[%s8 + $0x28] sm:$0xff]
    %v309 = vld [vmem:[%s8 + $0x30] sm:$0xff]
    %v310 = vld [vmem:[%s8 + $0x38] sm:$0xff]
    %v311 = vld [vmem:[%s8 + $0x40] sm:$0xff]
    %v312 = vld [vmem:[%s8 + $0x48] sm:$0xff]
    %v313 = vld [vmem:[%s8 + $0x50] sm:$0xff]
    %v314 = vld [vmem:[%s8 + $0x58] sm:$0xff]
    %v315 = vld [vmem:[%s8 + $0x60] sm:$0xff]
    %v316 = vld [vmem:[%s8 + $0x68] sm:$0xff]
    %v317 = vld [vmem:[%s8 + $0x70] sm:$0xff]
    %v318 = vld [vmem:[%s8 + $0x78] sm:$0xff]
    %v319 = vld [vmem:[%s8 + $0x80] sm:$0xff]
    %v320 = vld [vmem:[%s8 + $0x88] sm:$0xff]
    %v321 = vld [vmem:[%s8 + $0x90] sm:$0xff]
    %v322 = vld [vmem:[%s8 + $0x98] sm:$0xff]
    %v323 = vld [vmem:[%s8 + $0xa0] sm:$0xff]
    %v324 = vld [vmem:[%s8 + $0xa8] sm:$0xff]
    %v325 = vld [vmem:[%s8 + $0xb0] sm:$0xff]
    %v326 = vld [vmem:[%s8 + $0xb8] sm:$0xff]
    %v327 = vld [vmem:[%s8 + $0xc0] sm:$0xff]
    %v328 = vld [vmem:[%s8 + $0xc8] sm:$0xff]
    %v329 = vld [vmem:[%s8 + $0xd0] sm:$0xff]
    %v330 = vld [vmem:[%s8 + $0xd8] sm:$0xff]
    %v331 = vld [vmem:[%s8 + $0xe0] sm:$0xff]
    %v332 = vld [vmem:[%s8 + $0xe8] sm:$0xff]
    %v333 = vld [vmem:[%s8 + $0xf0] sm:$0xff]
    %v334 = vld [vmem:[%s8 + $0xf8] sm:$0xff]
    %v335 = vld [vmem:[%s9] sm:$0x1]
    %336 = vmatprep.subr.mxu0 0.0
    %337 = vmatpush1.msra.mxu0 %v318
    %338 = vmatprep.subr.mxu0 0.0
    %339 = vmatpush1.msra.mxu0 %v317
    %340 = vmatprep.subr.mxu0 0.0
    %341 = vmatpush1.msra.mxu0 %v316
    %342 = vmatprep.subr.mxu0 0.0
    %343 = vmatpush1.msra.mxu0 %v315
    %344 = vmatprep.subr.mxu0 0.0
    %345 = vmatpush1.msra.mxu0 %v314
    %346 = vmatprep.subr.mxu0 0.0
    %347 = vmatpush1.msra.mxu0 %v313
    %348 = vmatprep.subr.mxu0 0.0
    %349 = vmatpush1.msra.mxu0 %v312
    %350 = vmatprep.subr.mxu0 0.0
    %351 = vmatpush1.msra.mxu0 %v311
    %352 = vmatprep.subr.mxu0 0.0
    %353 = vmatpush1.msra.mxu0 %v310
    %354 = vmatprep.subr.mxu0 0.0
    %355 = vmatpush1.msra.mxu0 %v309
    %356 = vmatprep.subr.mxu0 0.0
    %357 = vmatpush1.msra.mxu0 %v308
    %358 = vmatprep.subr.mxu0 0.0
    %359 = vmatpush1.msra.mxu0 %v307
    %360 = vmatprep.subr.mxu0 0.0
    %361 = vmatpush1.msra.mxu0 %v306
    %362 = vmatprep.subr.mxu0 0.0
    %363 = vmatpush1.msra.mxu0 %v305
    %364 = vmatprep.subr.mxu0 0.0
    %365 = vmatpush1.msra.mxu0 %v304
    %366 = vmatprep.subr.mxu0 0.0
    %367 = vmatpush1.msra.mxu0 %v303
    %368 = vmatprep.subr.mxu0 0.0
    %369 = vmatpush2.msra.mxu0 %v334
    %370 = vmatprep.subr.mxu0 0.0
    %371 = vmatpush2.msra.mxu0 %v333
    %372 = vmatprep.subr.mxu0 0.0
    %373 = vmatpush2.msra.mxu0 %v332
    %374 = vmatprep.subr.mxu0 0.0
    %375 = vmatpush2.msra.mxu0 %v331
    %376 = vmatprep.subr.mxu0 0.0
    %377 = vmatpush2.msra.mxu0 %v330
    %378 = vmatprep.subr.mxu0 0.0
    %379 = vmatpush2.msra.mxu0 %v329
    %380 = vmatprep.subr.mxu0 0.0
    %381 = vmatpush2.msra.mxu0 %v328
    %382 = vmatprep.subr.mxu0 0.0
    %383 = vmatpush2.msra.mxu0 %v327
    %384 = vmatprep.subr.mxu0 0.0
    %385 = vmatpush2.msra.mxu0 %v326
    %386 = vmatprep.subr.mxu0 0.0
    %387 = vmatpush2.msra.mxu0 %v325
    %388 = vmatprep.subr.mxu0 0.0
    %389 = vmatpush2.msra.mxu0 %v324
    %390 = vmatprep.subr.mxu0 0.0
    %391 = vmatpush2.msra.mxu0 %v323
    %392 = vmatprep.subr.mxu0 0.0
    %393 = vmatpush2.msra.mxu0 %v322
    %394 = vmatprep.subr.mxu0 0.0
    %395 = vmatpush2.msra.mxu0 %v321
    %396 = vmatprep.subr.mxu0 0.0
    %397 = vmatpush2.msra.mxu0 %v320
    %398 = vmatprep.subr.mxu0 0.0
    %399 = vmatpush2.msra.mxu0 %v319
    %400 = vmatprep.mubr.f32.mxu0 %v302
    %401 = vmatmul.mubr.f32.gmra.mxu0 %v301
    %v402 = vpop.f32.mrf.mxu0
    %v403 = vadd.f32 %v335, %v402
    %v404 = vpop.f32.mrf.mxu0
    %405 = vdwg.mxu0
    %v406 = vtanh.pop %v403
    %v407 = vrcp.pop 100.0
    %v408 = vmul.f32 %v406, %v407
    %v409 = vlaneseq
    %v410 = vand.u32 %v409, 127
    %v411 = vadd.f32 %v51, %v408
    %vm412 = vcmp.lt.s32.totalorder %v410, 4
    %v413 = vmax.f32 %v411, -1.0
    %v414 = vmin.f32 %v413, 1.0
    %v415 = vsel %vm412, %v414, %v411
    %vm416 = vcmask 155648
    %417 = vst.msk [vmem:[%s10] sm:$0x1] %vm416, %v415
    %vm418 = vcmp.eq.s32.totalorder %v410, 19
    %v419 = vsel %vm418, %v415, 0.0
    %v420 = vsel %vm416, %v419, 0.0
    %421 = vadd.xlane.f32.xlu0 %v420
    %v422 = vpop.xlane.xlu0 %421
    %v423 = vrsqrt.pop %v422
    %v424 = vmul.f32 %v422, %v423
    %vm425 = vcmp.eq.f32.partialorder %v422, inf
    %v426 = vsel %vm425, %v422, %v424
    %vm427 = vcmp.eq.f32.partialorder %v422, 0.0
    %v428 = vand.u32 %v422, 2147483648
    %v429 = vsel %vm427, %v428, %v426
    %v430 = vrcp.pop %v429
    %v431 = vmul.f32 1.0, %v430
    %vm432 = vcmp.eq.s32.totalorder %v410, 15
    %v433 = vsel %vm432, %v415, 0.0
    %v434 = vsel %vm416, %v433, 0.0
    %435 = vadd.xlane.f32.xlu0 %v434
    %v436 = vpop.xlane.xlu0 %435
    %v437 = vmul.f32 %v436, %v431
    %vm438 = vcmp.eq.s32.totalorder %v410, 11
    %v439 = vsel %vm438, %v415, 0.0
    %v440 = vsel %vm416, %v439, 0.0
    %441 = vadd.xlane.f32.xlu0 %v440
    %v442 = vpop.xlane.xlu0 %441
    %v443 = vmul.f32 %v442, %v431
    %vm444 = vcmp.eq.s32.totalorder %v410, 7
    %v445 = vsel %vm444, %v415, 0.0
    %v446 = vsel %vm416, %v445, 0.0
    %447 = vadd.xlane.f32.xlu0 %v446
    %v448 = vpop.xlane.xlu0 %447
    %v449 = vmul.f32 %v448, %v431
    %vm450 = vcmp.eq.s32.totalorder %v410, 14
    %v451 = vsel %vm450, %v415, 0.0
    %v452 = vsel %vm416, %v451, 0.0
    %453 = vadd.xlane.f32.xlu0 %v452
    %v454 = vpop.xlane.xlu0 %453
    %v455 = vmul.f32 %v437, %v437
    %v456 = vsub.f32 %v454, %v455
    %v457 = vrsqrt.pop %v456
    %v458 = vmul.f32 %v456, %v457
    %vm459 = vcmp.eq.f32.partialorder %v456, inf
    %v460 = vsel %vm459, %v456, %v458
    %vm461 = vcmp.eq.f32.partialorder %v456, 0.0
    %v462 = vand.u32 %v456, 2147483648
    %v463 = vsel %vm461, %v462, %v460
    %v464 = vrcp.pop %v463
    %v465 = vmul.f32 1.0, %v464
    %vm466 = vcmp.eq.s32.totalorder %v410, 10
    %v467 = vsel %vm466, %v415, 0.0
    %v468 = vsel %vm416, %v467, 0.0
    %469 = vadd.xlane.f32.xlu0 %v468
    %v470 = vpop.xlane.xlu0 %469
    %v471 = vmul.f32 %v443, %v437
    %v472 = vsub.f32 %v470, %v471
    %v473 = vmul.f32 %v472, %v465
    %vm474 = vcmp.eq.s32.totalorder %v410, 6
    %v475 = vsel %vm474, %v415, 0.0
    %v476 = vsel %vm416, %v475, 0.0
    %477 = vadd.xlane.f32.xlu0 %v476
    %v478 = vpop.xlane.xlu0 %477
    %v479 = vmul.f32 %v449, %v437
    %v480 = vsub.f32 %v478, %v479
    %v481 = vmul.f32 %v480, %v465
    %vm482 = vcmp.eq.s32.totalorder %v410, 9
    %v483 = vsel %vm482, %v415, 0.0
    %v484 = vsel %vm416, %v483, 0.0
    %485 = vadd.xlane.f32.xlu0 %v484
    %v486 = vpop.xlane.xlu0 %485
    %v487 = vmul.f32 %v443, %v443
    %v488 = vsub.f32 %v486, %v487
    %v489 = vmul.f32 %v473, %v473
    %v490 = vsub.f32 %v488, %v489
    %v491 = vrsqrt.pop %v490
    %v492 = vmul.f32 %v490, %v491
    %vm493 = vcmp.eq.f32.partialorder %v490, inf
    %v494 = vsel %vm493, %v490, %v492
    %vm495 = vcmp.eq.f32.partialorder %v490, 0.0
    %v496 = vand.u32 %v490, 2147483648
    %v497 = vsel %vm495, %v496, %v494
    %v498 = vrcp.pop %v497
    %v499 = vmul.f32 1.0, %v498
    %vm500 = vcmp.eq.s32.totalorder %v410, 5
    %v501 = vsel %vm500, %v415, 0.0
    %v502 = vsel %vm416, %v501, 0.0
    %503 = vadd.xlane.f32.xlu0 %v502
    %v504 = vpop.xlane.xlu0 %503
    %v505 = vmul.f32 %v449, %v443
    %v506 = vsub.f32 %v504, %v505
    %v507 = vmul.f32 %v481, %v473
    %v508 = vsub.f32 %v506, %v507
    %v509 = vmul.f32 %v508, %v499
    %vm510 = vcmp.eq.s32.totalorder %v410, 4
    %v511 = vsel %vm510, %v415, 0.0
    %v512 = vsel %vm416, %v511, 0.0
    %513 = vadd.xlane.f32.xlu0 %v512
    %v514 = vpop.xlane.xlu0 %513
    %v515 = vmul.f32 %v449, %v449
    %v516 = vsub.f32 %v514, %v515
    %v517 = vmul.f32 %v481, %v481
    %v518 = vsub.f32 %v516, %v517
    %v519 = vmul.f32 %v509, %v509
    %v520 = vsub.f32 %v518, %v519
    %v521 = vrsqrt.pop %v520
    %v522 = vmul.f32 %v520, %v521
    %vm523 = vcmp.eq.f32.partialorder %v520, inf
    %v524 = vsel %vm523, %v520, %v522
    %vm525 = vcmp.eq.f32.partialorder %v520, 0.0
    %v526 = vand.u32 %v520, 2147483648
    %v527 = vsel %vm525, %v526, %v524
    %v528 = vld [vmem:[%s1] sm:$0x1]
    %vm529 = vcmp.eq.s32.totalorder %v410, 0
    %v530 = vsel %vm529, %v528, 0.0
    %vm531 = vcmask 24576
    %v532 = vsel %vm531, %v530, 0.0
    %533 = vadd.xlane.f32.xlu0 %v532
    %v534 = vpop.xlane.xlu0 %533
    %v535 = vrcp.pop %v527
    %v536 = vmul.f32 %v534, %v535
    %vm537 = vcmp.eq.s32.totalorder %v410, 1
    %v538 = vsel %vm537, %v528, 0.0
    %v539 = vsel %vm531, %v538, 0.0
    %540 = vadd.xlane.f32.xlu0 %v539
    %v541 = vpop.xlane.xlu0 %540
    %v542 = vmul.f32 %v509, %v536
    %v543 = vsub.f32 %v541, %v542
    %v544 = vmul.f32 %v543, %v498
    %vm545 = vcmp.eq.s32.totalorder %v410, 2
    %v546 = vsel %vm545, %v528, 0.0
    %v547 = vsel %vm531, %v546, 0.0
    %548 = vadd.xlane.f32.xlu0 %v547
    %v549 = vpop.xlane.xlu0 %548
    %v550 = vmul.f32 %v481, %v536
    %v551 = vsub.f32 %v549, %v550
    %v552 = vmul.f32 %v473, %v544
    %v553 = vsub.f32 %v551, %v552
    %v554 = vmul.f32 %v553, %v464
    %vm555 = vcmp.eq.s32.totalorder %v410, 3
    %v556 = vsel %vm555, %v528, 0.0
    %v557 = vsel %vm531, %v556, 0.0
    %558 = vadd.xlane.f32.xlu0 %v557
    %v559 = vpop.xlane.xlu0 %558
    %v560 = vmul.f32 %v449, %v536
    %v561 = vsub.f32 %v559, %v560
    %v562 = vmul.f32 %v443, %v544
    %v563 = vsub.f32 %v561, %v562
    %v564 = vmul.f32 %v437, %v554
    %v565 = vsub.f32 %v563, %v564
    %v566 = vmul.f32 %v565, %v430
    %v567 = vsel %vm529, %v536, 0.0
    %v568 = vsel %vm537, %v544, %v567
    %v569 = vsel %vm545, %v554, %v568
    %v570 = vsel %vm555, %v566, %v569
    %v571 = vadd.f32 %v415, %v570
    %v572 = vld [vmem:[%s2] sm:$0x1]
    %v573 = vmul.f32 %v571, %v572
    %v574 = vld [vmem:[%s3] sm:$0x1]
    %v575 = vadd.f32 %v573, %v574
    %576 = vst.msk [vmem:[%s11] sm:$0x1] %vm531, %v575
    %v577 = vmul.f32 %v528, %v528
    %v578 = vsel %vm531, %v577, 0.0
    %579 = vadd.xlane.f32.xlu0 %v578
    %v580 = vpop.xlane.xlu0 %579
    %v581 = vlog2.pop %v429
    %v582 = vmul.f32 %v581, 0.6931472
    %v583 = vsub.f32 0.0, %v582
    %v584 = vlog2.pop %v463
    %v585 = vmul.f32 %v584, 0.6931472
    %v586 = vsub.f32 %v583, %v585
    %v587 = vlog2.pop %v497
    %v588 = vmul.f32 %v587, 0.6931472
    %v589 = vsub.f32 %v586, %v588
    %v590 = vlog2.pop %v527
    %v591 = vmul.f32 %v590, 0.6931472
    %v592 = vsub.f32 %v589, %v591
    %v593 = vadd.f32 %v580, 7.351508
    %v594 = vmul.f32 %v593, -0.5
    %v595 = vsub.f32 %v594, %v592
    %vm596 = vcmask 32800
    %597 = vst.msk [vmem:[%s11] sm:$0x1] %vm596, %v595
    // Predicated region
    $region46: #{learnable_gaussian_forward.1} parent=1 // pred_check
      _
    $region47: #{learnable_gaussian_forward.1} parent=1 // pred_check_branch
      %599 = sbr.rel (0) target = $region49
    $region48: #{learnable_gaussian_forward.1} parent=1 // pred_region
      _
    $region49: #{learnable_gaussian_forward.1} parent=1 // pred_fallthru
      _
    // Predicated region
    $region50: #{learnable_gaussian_forward.1} parent=1 // pred_check
      _
    $region51: #{learnable_gaussian_forward.1} parent=1 // pred_check_branch
      %601 = sbr.rel (0) target = $region53
    $region52: #{learnable_gaussian_forward.1} parent=1 // pred_region
      _
    $region53: #{learnable_gaussian_forward.1} parent=1 // pred_fallthru
      _
    // Predicated region
    $region54: #{learnable_gaussian_forward.1} parent=1 // pred_check
      _
    $region55: #{learnable_gaussian_forward.1} parent=1 // pred_check_branch
      %603 = sbr.rel (0) target = $region57
    $region56: #{learnable_gaussian_forward.1} parent=1 // pred_region
      _
    $region57: #{learnable_gaussian_forward.1} parent=1 // pred_fallthru
      _
    // Predicated region
    $region58: #{learnable_gaussian_forward.1} parent=1 // pred_check
      _
    $region59: #{learnable_gaussian_forward.1} parent=1 // pred_check_branch
      %605 = sbr.rel (0) target = $region61
    $region60: #{learnable_gaussian_forward.1} parent=1 // pred_region
      _
    $region61: #{learnable_gaussian_forward.1} parent=1 // pred_fallthru
      _
    %606 = vsyncpa [#allocation3], 1

</llo_original>
